<compile_context>
chip_gen: v7x
topology: tpu7x:2x2x1
jax: 0.10.0
libtpu: 0.0.40
codegen_flags: <defaults>
</compile_context>

<pallas_src>
import functools

import jax
import jax.numpy as jnp
from jax.experimental import pallas as pl
from jax.experimental.pallas import tpu as pltpu


def _round_up(x, m):
    return (x + m - 1) // m * m


# ----------------------------------------------------------------------------
# Fused kernel: transform (once per row tile) + decoder (per vocab tile)
# ----------------------------------------------------------------------------
def _fused_head_kernel(x_ref, w1_ref, b1_ref, gamma_ref, beta_ref,
                       w2_ref, bias_ref, o_ref, t_scratch, *, eps):
    j = pl.program_id(1)  # vocab-tile index (innermost grid axis)

    @pl.when(j == 0)
    def _():
        # dense: [tm, H](bf16) x [H, H](bf16) -> f32 accumulate on the MXU
        h = jnp.dot(x_ref[...], w1_ref[...],
                    preferred_element_type=jnp.float32) + b1_ref[...]

        # TODO(synk): ACT2FN['gelu'] in the PyTorch file is the exact erf-GELU;
        # Mosaic has no erf lowering, so we use the tanh approximation
        # (max diff ~1e-3 vs erf), computed in f32 (tanh runs on the EUP).
        h = jax.nn.gelu(h, approximate=True)

        # LayerNorm over the hidden axis, biased variance (PyTorch semantics),
        # all statistics in f32.
        mu = jnp.mean(h, axis=-1, keepdims=True)
        c = h - mu
        var = jnp.mean(c * c, axis=-1, keepdims=True)
        t = c * jax.lax.rsqrt(var + eps) * gamma_ref[...] + beta_ref[...]

        # Hold the normalized activations in VMEM (bf16) for all vocab tiles.
        t_scratch[...] = t.astype(t_scratch.dtype)

    # decoder: [tm, H](bf16) x [H, tv](bf16) -> f32 logits + bias
    o_ref[...] = (
        jnp.dot(t_scratch[...], w2_ref[...], preferred_element_type=jnp.float32)
        + bias_ref[...]
    )


# ----------------------------------------------------------------------------
# Wrapper: padding, tiling, dtype handling
# ----------------------------------------------------------------------------
def bert_lm_prediction_head(hidden_states, params, *, eps=1e-12,
                            tm_target=256, tv_target=512):
    b, s, h = hidden_states.shape
    n = b * s
    v = params["w2"].shape[1]

    # Row tile: multiple of 8 (sublane), capped at tm_target; pad N to a
    # multiple of it.  Vocab tile: multiple of 128 (lane), >=512 when possible.
    tm = min(tm_target, _round_up(n, 8))
    n_pad = _round_up(n, tm)
    tv = min(tv_target, _round_up(v, 128))
    v_pad = _round_up(v, tv)

    # bf16 matmul operands (f32 accumulation happens on the MXU).
    x_bf = hidden_states.reshape(n, h).astype(jnp.bfloat16)
    if n_pad != n:
        x_bf = jnp.pad(x_bf, ((0, n_pad - n), (0, 0)))
    w1 = params["w1"].astype(jnp.bfloat16)
    w2 = params["w2"].astype(jnp.bfloat16)
    bias = params["bias"].astype(jnp.float32)
    if v_pad != v:
        w2 = jnp.pad(w2, ((0, 0), (0, v_pad - v)))
        bias = jnp.pad(bias, (0, v_pad - v))

    b1 = params["b1"].astype(jnp.float32).reshape(1, h)
    gamma = params["gamma"].astype(jnp.float32).reshape(1, h)
    beta = params["beta"].astype(jnp.float32).reshape(1, h)
    bias = bias.reshape(1, v_pad)

    grid = (n_pad // tm, v_pad // tv)

    cost = pl.CostEstimate(
        flops=2 * n_pad * h * h + 2 * n_pad * h * v_pad,
        transcendentals=n_pad * h,
        bytes_accessed=(n_pad * h * 2 + h * h * 2 + h * v_pad * 2
                        + n_pad * v_pad * 4),
    )

    out = pl.pallas_call(
        functools.partial(_fused_head_kernel, eps=eps),
        out_shape=jax.ShapeDtypeStruct((n_pad, v_pad), jnp.float32),
        grid_spec=pltpu.PrefetchScalarGridSpec(
            num_scalar_prefetch=0,
            grid=grid,
            in_specs=[
                pl.BlockSpec((tm, h), lambda i, j: (i, 0)),   # x row tile
                pl.BlockSpec((h, h), lambda i, j: (0, 0)),    # W1 (resident)
                pl.BlockSpec((1, h), lambda i, j: (0, 0)),    # b1
                pl.BlockSpec((1, h), lambda i, j: (0, 0)),    # gamma
                pl.BlockSpec((1, h), lambda i, j: (0, 0)),    # beta
                pl.BlockSpec((h, tv), lambda i, j: (0, j)),   # W2 vocab tile
                pl.BlockSpec((1, tv), lambda i, j: (0, j)),   # bias vocab tile
            ],
            out_specs=pl.BlockSpec((tm, tv), lambda i, j: (i, j)),
            scratch_shapes=[pltpu.VMEM((tm, h), jnp.bfloat16)],
        ),
        compiler_params=pltpu.CompilerParams(
            dimension_semantics=("parallel", "arbitrary"),
            vmem_limit_bytes=48 * 1024 * 1024,
        ),
        cost_estimate=cost,
    )(x_bf, w1, b1, gamma, beta, w2, bias)

    return out[:n, :v].reshape(b, s, v)


# ----------------------------------------------------------------------------
# Pure-JAX reference (same bf16 matmul / f32 norm policy) for the sanity check
# ----------------------------------------------------------------------------
def _ref(hidden_states, params, *, eps=1e-12):
    b, s, h = hidden_states.shape
    x = hidden_states.reshape(b * s, h).astype(jnp.bfloat16)
    hh = jnp.dot(x, params["w1"].astype(jnp.bfloat16),
                 preferred_element_type=jnp.float32) + params["b1"]
    hh = jax.nn.gelu(hh, approximate=True)
    mu = jnp.mean(hh, axis=-1, keepdims=True)
    var = jnp.mean((hh - mu) ** 2, axis=-1, keepdims=True)
    t = (hh - mu) * jax.lax.rsqrt(var + eps) * params["gamma"] + params["beta"]
    t = t.astype(jnp.bfloat16)
    logits = jnp.dot(t, params["w2"].astype(jnp.bfloat16),
                     preferred_element_type=jnp.float32) + params["bias"]
    return logits.reshape(b, s, -1)


if __name__ == "__main__":
    # Small config consistent with the module.  vocab=1000 deliberately is NOT
    # a multiple of the vocab tile, exercising the padding path.
    batch, seq, hidden, vocab = 2, 8, 128, 1000
    key = jax.random.PRNGKey(0)
    k0, k1, k2, k3 = jax.random.split(key, 4)

    params = {
        # nn.Linear(hidden, hidden): stored as [in, out] so y = x @ W + b
        "w1": jax.random.normal(k1, (hidden, hidden), jnp.float32) * 0.02,
        "b1": jax.random.normal(k2, (hidden,), jnp.float32) * 0.02,
        # LayerNorm(hidden)
        "gamma": jnp.ones((hidden,), jnp.float32),
        "beta": jnp.zeros((hidden,), jnp.float32),
        # decoder: nn.Linear(hidden, vocab, bias=False) + separate bias param
        "w2": jax.random.normal(k3, (hidden, vocab), jnp.float32) * 0.02,
        "bias": jnp.zeros((vocab,), jnp.float32),
    }

    x = jax.random.normal(k0, (batch, seq, hidden), jnp.float32)

    out = bert_lm_prediction_head(x, params)
    out = jax.block_until_ready(out)

    ref = _ref(x, params)
    assert out.shape == (batch, seq, vocab), out.shape
    err = float(jnp.max(jnp.abs(out - ref)))
    assert jnp.allclose(out, ref, atol=5e-3, rtol=5e-3), err
    print("KERNEL_OK")
</pallas_src>

<mosaic_0001>
module attributes {stable_mosaic.version = 11 : i64} {
  func.func @_fused_head_kernel(%arg0: i32, %arg1: i32, %arg2: memref<16x128xbf16, #tpu.memory_space<vmem>>, %arg3: memref<128x128xbf16, #tpu.memory_space<vmem>>, %arg4: memref<1x128xf32, #tpu.memory_space<vmem>>, %arg5: memref<1x128xf32, #tpu.memory_space<vmem>>, %arg6: memref<1x128xf32, #tpu.memory_space<vmem>>, %arg7: memref<128x512xbf16, #tpu.memory_space<vmem>>, %arg8: memref<1x512xf32, #tpu.memory_space<vmem>>, %arg9: memref<16x512xf32, #tpu.memory_space<vmem>>, %arg10: memref<16x128xbf16, #tpu.memory_space<vmem>>) attributes {dimension_semantics = [#tpu.dimension_semantics<parallel>, #tpu.dimension_semantics<arbitrary>], iteration_bounds = array<i64: 1, 2>, scalar_prefetch = 0 : i64, scratch_operands = 1 : i64, tpu.core_type = #tpu.core_type<tc>, window_params = [{transform_indices = @transform_0, window_bounds = array<i64: 16, 128>}, {pipeline_mode = #tpu.pipeline_mode<synchronous>, transform_indices = @transform_1, window_bounds = array<i64: 128, 128>}, {pipeline_mode = #tpu.pipeline_mode<synchronous>, transform_indices = @transform_2, window_bounds = array<i64: 1, 128>}, {pipeline_mode = #tpu.pipeline_mode<synchronous>, transform_indices = @transform_3, window_bounds = array<i64: 1, 128>}, {pipeline_mode = #tpu.pipeline_mode<synchronous>, transform_indices = @transform_4, window_bounds = array<i64: 1, 128>}, {transform_indices = @transform_5, window_bounds = array<i64: 128, 512>}, {transform_indices = @transform_6, window_bounds = array<i64: 1, 512>}, {transform_indices = @transform_7, window_bounds = array<i64: 16, 512>}]} {
    %c0_i32 = arith.constant 0 : i32
    %0 = arith.cmpi eq, %arg1, %c0_i32 : i32
    %1 = arith.extui %0 : i1 to i32
    %c0_i32_0 = arith.constant 0 : i32
    %2 = arith.cmpi ne, %1, %c0_i32_0 : i32
    scf.if %2 {
      %c0_8 = arith.constant 0 : index
      %c0_9 = arith.constant 0 : index
      %10 = vector.load %arg2[%c0_8, %c0_9] : memref<16x128xbf16, #tpu.memory_space<vmem>>, vector<16x128xbf16>
      %c0_10 = arith.constant 0 : index
      %c0_11 = arith.constant 0 : index
      %11 = vector.load %arg3[%c0_10, %c0_11] : memref<128x128xbf16, #tpu.memory_space<vmem>>, vector<128x128xbf16>
      %cst_12 = arith.constant dense<0.000000e+00> : vector<16x128xf32>
      %12 = tpu.matmul %10, %11, %cst_12 {dimension_numbers = #tpu.dot_dimension_numbers<[1], [0], [0], [1], [0, 0, 1, 1], [], []>} : vector<16x128xbf16>, vector<128x128xbf16>, vector<16x128xf32> -> vector<16x128xf32>
      %c0_13 = arith.constant 0 : index
      %c0_14 = arith.constant 0 : index
      %13 = vector.load %arg4[%c0_13, %c0_14] : memref<1x128xf32, #tpu.memory_space<vmem>>, vector<1x128xf32>
      %14 = vector.broadcast %13 : vector<1x128xf32> to vector<16x128xf32>
      %15 = arith.addf %12, %14 : vector<16x128xf32>
      %16 = arith.mulf %15, %15 : vector<16x128xf32>
      %17 = arith.mulf %15, %16 : vector<16x128xf32>
      %cst_15 = arith.constant 4.471500e-02 : f32
      %18 = vector.broadcast %cst_15 : f32 to vector<16x128xf32>
      %19 = arith.mulf %18, %17 : vector<16x128xf32>
      %20 = arith.addf %15, %19 : vector<16x128xf32>
      %cst_16 = arith.constant 0.797884583 : f32
      %21 = vector.broadcast %cst_16 : f32 to vector<16x128xf32>
      %22 = arith.mulf %21, %20 : vector<16x128xf32>
      %23 = math.tanh %22 : vector<16x128xf32>
      %cst_17 = arith.constant 1.000000e+00 : f32
      %24 = vector.broadcast %cst_17 : f32 to vector<16x128xf32>
      %25 = arith.addf %24, %23 : vector<16x128xf32>
      %cst_18 = arith.constant 5.000000e-01 : f32
      %26 = vector.broadcast %cst_18 : f32 to vector<16x128xf32>
      %27 = arith.mulf %26, %25 : vector<16x128xf32>
      %28 = arith.mulf %15, %27 : vector<16x128xf32>
      %cst_19 = arith.constant dense<0.000000e+00> : vector<16xf32>
      %29 = vector.multi_reduction <add>, %28, %cst_19 [1] : vector<16x128xf32> to vector<16xf32>
      %30 = vector.shape_cast %29 : vector<16xf32> to vector<16x1xf32>
      %cst_20 = arith.constant 1.280000e+02 : f32
      %31 = vector.broadcast %cst_20 : f32 to vector<16x1xf32>
      %32 = arith.divf %30, %31 : vector<16x1xf32>
      %33 = vector.broadcast %32 : vector<16x1xf32> to vector<16x128xf32>
      %34 = arith.subf %28, %33 : vector<16x128xf32>
      %35 = arith.mulf %34, %34 : vector<16x128xf32>
      %cst_21 = arith.constant dense<0.000000e+00> : vector<16xf32>
      %36 = vector.multi_reduction <add>, %35, %cst_21 [1] : vector<16x128xf32> to vector<16xf32>
      %37 = vector.shape_cast %36 : vector<16xf32> to vector<16x1xf32>
      %cst_22 = arith.constant 1.280000e+02 : f32
      %38 = vector.broadcast %cst_22 : f32 to vector<16x1xf32>
      %39 = arith.divf %37, %38 : vector<16x1xf32>
      %cst_23 = arith.constant 9.99999996E-13 : f32
      %40 = vector.broadcast %cst_23 : f32 to vector<16x1xf32>
      %41 = arith.addf %39, %40 : vector<16x1xf32>
      %42 = math.rsqrt %41 : vector<16x1xf32>
      %43 = vector.broadcast %42 : vector<16x1xf32> to vector<16x128xf32>
      %44 = arith.mulf %34, %43 : vector<16x128xf32>
      %c0_24 = arith.constant 0 : index
      %c0_25 = arith.constant 0 : index
      %45 = vector.load %arg5[%c0_24, %c0_25] : memref<1x128xf32, #tpu.memory_space<vmem>>, vector<1x128xf32>
      %46 = vector.broadcast %45 : vector<1x128xf32> to vector<16x128xf32>
      %47 = arith.mulf %44, %46 : vector<16x128xf32>
      %c0_26 = arith.constant 0 : index
      %c0_27 = arith.constant 0 : index
      %48 = vector.load %arg6[%c0_26, %c0_27] : memref<1x128xf32, #tpu.memory_space<vmem>>, vector<1x128xf32>
      %49 = vector.broadcast %48 : vector<1x128xf32> to vector<16x128xf32>
      %50 = arith.addf %47, %49 : vector<16x128xf32>
      %51 = arith.truncf %50 : vector<16x128xf32> to vector<16x128xbf16>
      %c0_28 = arith.constant 0 : index
      %c0_29 = arith.constant 0 : index
      %52 = vector.load %arg10[%c0_28, %c0_29] : memref<16x128xbf16, #tpu.memory_space<vmem>>, vector<16x128xbf16>
      tpu.vector_store %arg10[%c0_28, %c0_29], %51 {strides = array<i32>} : memref<16x128xbf16, #tpu.memory_space<vmem>>, vector<16x128xbf16>,
    } else {
    }
    %c0 = arith.constant 0 : index
    %c0_1 = arith.constant 0 : index
    %3 = vector.load %arg10[%c0, %c0_1] : memref<16x128xbf16, #tpu.memory_space<vmem>>, vector<16x128xbf16>
    %c0_2 = arith.constant 0 : index
    %c0_3 = arith.constant 0 : index
    %4 = vector.load %arg7[%c0_2, %c0_3] : memref<128x512xbf16, #tpu.memory_space<vmem>>, vector<128x512xbf16>
    %cst = arith.constant dense<0.000000e+00> : vector<16x512xf32>
    %5 = tpu.matmul %3, %4, %cst {dimension_numbers = #tpu.dot_dimension_numbers<[1], [0], [0], [1], [0, 0, 1, 1], [], []>} : vector<16x128xbf16>, vector<128x512xbf16>, vector<16x512xf32> -> vector<16x512xf32>
    %c0_4 = arith.constant 0 : index
    %c0_5 = arith.constant 0 : index
    %6 = vector.load %arg8[%c0_4, %c0_5] : memref<1x512xf32, #tpu.memory_space<vmem>>, vector<1x512xf32>
    %7 = vector.broadcast %6 : vector<1x512xf32> to vector<16x512xf32>
    %8 = arith.addf %5, %7 : vector<16x512xf32>
    %c0_6 = arith.constant 0 : index
    %c0_7 = arith.constant 0 : index
    %9 = vector.load %arg9[%c0_6, %c0_7] : memref<16x512xf32, #tpu.memory_space<vmem>>, vector<16x512xf32>
    tpu.vector_store %arg9[%c0_6, %c0_7], %8 {strides = array<i32>} : memref<16x512xf32, #tpu.memory_space<vmem>>, vector<16x512xf32>,
    return
  }
  func.func @transform_0(%arg0: i32, %arg1: i32) -> (i32, i32) {
    %c0_i32 = arith.constant 0 : i32
    %c0_i32_0 = arith.constant 0 : i32
    return %arg0, %c0_i32 : i32, i32
  }
  func.func @transform_1(%arg0: i32, %arg1: i32) -> (i32, i32) {
    %c0_i32 = arith.constant 0 : i32
    %c0_i32_0 = arith.constant 0 : i32
    %c0_i32_1 = arith.constant 0 : i32
    return %c0_i32, %c0_i32_0 : i32, i32
  }
  func.func @transform_2(%arg0: i32, %arg1: i32) -> (i32, i32) {
    %c0_i32 = arith.constant 0 : i32
    %c0_i32_0 = arith.constant 0 : i32
    %c0_i32_1 = arith.constant 0 : i32
    return %c0_i32, %c0_i32_0 : i32, i32
  }
  func.func @transform_3(%arg0: i32, %arg1: i32) -> (i32, i32) {
    %c0_i32 = arith.constant 0 : i32
    %c0_i32_0 = arith.constant 0 : i32
    %c0_i32_1 = arith.constant 0 : i32
    return %c0_i32, %c0_i32_0 : i32, i32
  }
  func.func @transform_4(%arg0: i32, %arg1: i32) -> (i32, i32) {
    %c0_i32 = arith.constant 0 : i32
    %c0_i32_0 = arith.constant 0 : i32
    %c0_i32_1 = arith.constant 0 : i32
    return %c0_i32, %c0_i32_0 : i32, i32
  }
  func.func @transform_5(%arg0: i32, %arg1: i32) -> (i32, i32) {
    %c0_i32 = arith.constant 0 : i32
    %c0_i32_0 = arith.constant 0 : i32
    return %c0_i32, %arg1 : i32, i32
  }
  func.func @transform_6(%arg0: i32, %arg1: i32) -> (i32, i32) {
    %c0_i32 = arith.constant 0 : i32
    %c0_i32_0 = arith.constant 0 : i32
    return %c0_i32, %arg1 : i32, i32
  }
  func.func @transform_7(%arg0: i32, %arg1: i32) -> (i32, i32) {
    %c0_i32 = arith.constant 0 : i32
    return %arg0, %arg1 : i32, i32
  }
}

</mosaic_0001>

<llo_original>
// kernel: tpu_custom_call.1
$region0: #{tpu_custom_call.1}
  #allocation0 [shape = 'u32[]', space=smem, size = 0x4, offset = 0x4, fixed_abs, tag = 'smem constant byte address 0x4 - core index']
  #allocation1 [shape = 'u32[144,128]{1,0:T(1,128)}', space=vmem, size = 0x12000, scoped, tag = 'internal scratch']
  #allocation2 [shape = 'bf16[16,128]{1,0:T(16,128)(2,1)}', space=vmem, size = 0x1000, scoped, tag = 'scratch operand']
  %s0 = inlined_call_operand.hbm [shape: bf16[16,128], index: 0, kind: input, shape index: {}]
  %s1 = inlined_call_operand.hbm [shape: bf16[128,128], index: 1, kind: input, shape index: {}]
  %s2 = inlined_call_operand.vmem [shape: f32[1,128], index: 2, kind: input, shape index: {}]
  %s3 = inlined_call_operand.vmem [shape: f32[1,128], index: 3, kind: input, shape index: {}]
  %s4 = inlined_call_operand.vmem [shape: f32[1,128], index: 4, kind: input, shape index: {}]
  %s5 = inlined_call_operand.hbm [shape: bf16[128,1024], index: 5, kind: input, shape index: {}]
  %s6 = inlined_call_operand.vmem [shape: f32[1,1024], index: 6, kind: input, shape index: {}]
  %s7 = inlined_call_operand.hbm [shape: f32[16,1024], index: 7, kind: output, shape index: {}]
  %s8 = sld [smem:[#allocation0]]
  $region77: #{tpu_custom_call.1} parent=0
    _
  %s10 = ssub.s32 1, %s8
  %s11 = scalar_select 0, %s10, %s8
  $region1: #{tpu_custom_call.1} parent=0
    #allocation3 [shape = 'u8[4096]{0}', space=vmem, size = 0x1000, scoped, tag = 'input window, operand 0, single buffered']
    #allocation4 [shape = 's32[2]{0}', space=sflag, size = 0x8, scoped, tag = 'scoped memory for tpu_custom_call.1']
    #allocation5 [shape = 's32[2]{0}', space=sflag, size = 0x8, scoped, tag = 'scoped memory for tpu_custom_call.1']
    #allocation6 [shape = 'u8[32768]{0}', space=vmem, size = 0x8000, scoped, tag = 'input window, operand 1, single buffered']
    #allocation7 [shape = 's32[1]{0}', space=sflag, size = 0x4, scoped, tag = 'scoped memory for tpu_custom_call.1']
    #allocation8 [shape = 'u8[262144]{0}', space=vmem, size = 0x40000, scoped, tag = 'input window, operand 5']
    #allocation9 [shape = 'u8[65536]{0}', space=vmem, size = 0x10000, scoped, tag = 'output window, operand 0']
    %12 = vsyncpa [#allocation4], 0
    %13 = vsyncpa [#allocation7], 0
    %14 = vsyncpa [#allocation5], 0
    %s15 = scalar_lea.sflag [#allocation5], 1
    %16 = vsyncpa %s15, 0
    loop: start=0, step=1, limit=4
    $region2: #{tpu_custom_call.1} parent=1 // loop_pre_header
      _
    $region3: #{tpu_custom_call.1} parent=1 // loop_header
      %s18 = sphi 0, %s22
      %p19 = scmp.ge.s32.totalorder %s18, 4
      %s25 = sphi 0, %s37
      %s26 = sphi 0, %s33
      %s27 = sphi 0, %s25
      %s28 = sphi 0, %s26
      %s29 = sphi 0, %s27
      %s30 = sphi 0, %s28
      %s40 = sphi 0, %s42
      %s43 = sphi 0, %s40
      %s44 = sphi 0, %s43
      %s60 = sphi 0, %s44
      %s64 = sphi 0, %s64
      %s66 = sphi 0, %s64
      %s67 = sphi 0, %s66
      %s81 = sphi 0, %s67
      %s85 = sphi 0, %s85
      %s87 = sphi 0, %s85
      %s88 = sphi 0, %s87
      %s102 = sphi 0, %s88
      %s106 = sphi 0, %s106
      %s108 = sphi 0, %s106
      %s109 = sphi 0, %s108
      %s123 = sphi 0, %s109
      %s127 = sphi 0, %s127
      %s129 = sphi 0, %s127
      %s130 = sphi 0, %s129
      %s144 = sphi 0, %s130
      %s150 = sphi 0, %s152
      %s153 = sphi 0, %s150
      %s154 = sphi 0, %s153
      %s170 = sphi 0, %s154
      %s176 = sphi 0, %s178
      %s179 = sphi 0, %s176
      %s180 = sphi 0, %s179
      %s196 = sphi 0, %s180
      %s204 = sphi 0, %s206
      %s207 = sphi 0, %s204
      %s208 = sphi 0, %s207
      %s224 = sphi 0, %s208
    $region4: #{tpu_custom_call.1} parent=1 // loop_header_branch
      %21 = sbr.rel (%p19) target = $region8
    $region5: #{tpu_custom_call.1} parent=1 // loop_body
      %s23 = ssub.s32 %s18, 1
      %s24 = ssub.s32 %s18, 2
      %s31 = sadd.s32 1, %s26
      %p32 = scmp.ge.s32.totalorder %s31, 2
      %s33 = scalar_select %p32, 0, %s31
      %s34 = sadd.s32 1, %s25
      %s35 = scalar_select %p32, %s34, %s25
      %p36 = scmp.ge.s32.totalorder %s35, 1
      %s37 = scalar_select %p36, 0, %s35
      %s38 = ssub.s32 %s25, %s37
      %p39 = scmp.eq.s32.totalorder %s38, 0
      %s41 = sadd.s32 %s40, 1
      %s42 = scalar_select %p39, %s40, %s41
      %p45 = pneg %p39
      %p46 = scmp.eq.s32.totalorder %s18, 1
      %p47 = por %p45, %p46
      %p48 = scmp.ne.s32.totalorder %s40, %s43
      %p49 = scmp.eq.s32.totalorder %s18, 0
      %p50 = por %p48, %p49
      %p51 = scmp.ne.s32.totalorder %s40, %s43
      %p52 = scmp.eq.s32.totalorder %s23, 1
      %p53 = por %p51, %p52
      %p54 = scmp.ne.s32.totalorder %s43, %s44
      %p55 = scmp.eq.s32.totalorder %s23, 0
      %p56 = por %p54, %p55
      %p57 = scmp.ne.s32.totalorder %s43, %s44
      %p58 = scmp.eq.s32.totalorder %s24, 1
      %p59 = por %p57, %p58
      %p61 = scmp.ne.s32.totalorder %s44, %s60
      %p62 = scmp.eq.s32.totalorder %s24, 0
      %p63 = por %p61, %p62
      %s65 = sadd.s32 %s64, 1
      %p68 = scmp.eq.s32.totalorder %s18, 1
      %p69 = scmp.ne.s32.totalorder %s64, %s66
      %p70 = scmp.eq.s32.totalorder %s18, 0
      %p71 = por %p69, %p70
      %p72 = scmp.ne.s32.totalorder %s64, %s66
      %p73 = scmp.eq.s32.totalorder %s23, 1
      %p74 = por %p72, %p73
      %p75 = scmp.ne.s32.totalorder %s66, %s67
      %p76 = scmp.eq.s32.totalorder %s23, 0
      %p77 = por %p75, %p76
      %p78 = scmp.ne.s32.totalorder %s66, %s67
      %p79 = scmp.eq.s32.totalorder %s24, 1
      %p80 = por %p78, %p79
      %p82 = scmp.ne.s32.totalorder %s67, %s81
      %p83 = scmp.eq.s32.totalorder %s24, 0
      %p84 = por %p82, %p83
      %s86 = sadd.s32 %s85, 1
      %p89 = scmp.eq.s32.totalorder %s18, 1
      %p90 = scmp.ne.s32.totalorder %s85, %s87
      %p91 = scmp.eq.s32.totalorder %s18, 0
      %p92 = por %p90, %p91
      %p93 = scmp.ne.s32.totalorder %s85, %s87
      %p94 = scmp.eq.s32.totalorder %s23, 1
      %p95 = por %p93, %p94
      %p96 = scmp.ne.s32.totalorder %s87, %s88
      %p97 = scmp.eq.s32.totalorder %s23, 0
      %p98 = por %p96, %p97
      %p99 = scmp.ne.s32.totalorder %s87, %s88
      %p100 = scmp.eq.s32.totalorder %s24, 1
      %p101 = por %p99, %p100
      %p103 = scmp.ne.s32.totalorder %s88, %s102
      %p104 = scmp.eq.s32.totalorder %s24, 0
      %p105 = por %p103, %p104
      %s107 = sadd.s32 %s106, 1
      %p110 = scmp.eq.s32.totalorder %s18, 1
      %p111 = scmp.ne.s32.totalorder %s106, %s108
      %p112 = scmp.eq.s32.totalorder %s18, 0
      %p113 = por %p111, %p112
      %p114 = scmp.ne.s32.totalorder %s106, %s108
      %p115 = scmp.eq.s32.totalorder %s23, 1
      %p116 = por %p114, %p115
      %p117 = scmp.ne.s32.totalorder %s108, %s109
      %p118 = scmp.eq.s32.totalorder %s23, 0
      %p119 = por %p117, %p118
      %p120 = scmp.ne.s32.totalorder %s108, %s109
      %p121 = scmp.eq.s32.totalorder %s24, 1
      %p122 = por %p120, %p121
      %p124 = scmp.ne.s32.totalorder %s109, %s123
      %p125 = scmp.eq.s32.totalorder %s24, 0
      %p126 = por %p124, %p125
      %s128 = sadd.s32 %s127, 1
      %p131 = scmp.eq.s32.totalorder %s18, 1
      %p132 = scmp.ne.s32.totalorder %s127, %s129
      %p133 = scmp.eq.s32.totalorder %s18, 0
      %p134 = por %p132, %p133
      %p135 = scmp.ne.s32.totalorder %s127, %s129
      %p136 = scmp.eq.s32.totalorder %s23, 1
      %p137 = por %p135, %p136
      %p138 = scmp.ne.s32.totalorder %s129, %s130
      %p139 = scmp.eq.s32.totalorder %s23, 0
      %p140 = por %p138, %p139
      %p141 = scmp.ne.s32.totalorder %s129, %s130
      %p142 = scmp.eq.s32.totalorder %s24, 1
      %p143 = por %p141, %p142
      %p145 = scmp.ne.s32.totalorder %s130, %s144
      %p146 = scmp.eq.s32.totalorder %s24, 0
      %p147 = por %p145, %p146
      %s148 = ssub.s32 %s26, %s33
      %p149 = scmp.eq.s32.totalorder %s148, 0
      %s151 = sadd.s32 %s150, 1
      %s152 = scalar_select %p149, %s150, %s151
      %p155 = pneg %p149
      %p156 = scmp.eq.s32.totalorder %s18, 1
      %p157 = por %p155, %p156
      %p158 = scmp.ne.s32.totalorder %s150, %s153
      %p159 = scmp.eq.s32.totalorder %s18, 0
      %p160 = por %p158, %p159
      %p161 = scmp.ne.s32.totalorder %s150, %s153
      %p162 = scmp.eq.s32.totalorder %s23, 1
      %p163 = por %p161, %p162
      %p164 = scmp.ne.s32.totalorder %s153, %s154
      %p165 = scmp.eq.s32.totalorder %s23, 0
      %p166 = por %p164, %p165
      %p167 = scmp.ne.s32.totalorder %s153, %s154
      %p168 = scmp.eq.s32.totalorder %s24, 1
      %p169 = por %p167, %p168
      %p171 = scmp.ne.s32.totalorder %s154, %s170
      %p172 = scmp.eq.s32.totalorder %s24, 0
      %p173 = por %p171, %p172
      %s174 = ssub.s32 %s26, %s33
      %p175 = scmp.eq.s32.totalorder %s174, 0
      %s177 = sadd.s32 %s176, 1
      %s178 = scalar_select %p175, %s176, %s177
      %p181 = pneg %p175
      %p182 = scmp.eq.s32.totalorder %s18, 1
      %p183 = por %p181, %p182
      %p184 = scmp.ne.s32.totalorder %s176, %s179
      %p185 = scmp.eq.s32.totalorder %s18, 0
      %p186 = por %p184, %p185
      %p187 = scmp.ne.s32.totalorder %s176, %s179
      %p188 = scmp.eq.s32.totalorder %s23, 1
      %p189 = por %p187, %p188
      %p190 = scmp.ne.s32.totalorder %s179, %s180
      %p191 = scmp.eq.s32.totalorder %s23, 0
      %p192 = por %p190, %p191
      %p193 = scmp.ne.s32.totalorder %s179, %s180
      %p194 = scmp.eq.s32.totalorder %s24, 1
      %p195 = por %p193, %p194
      %p197 = scmp.ne.s32.totalorder %s180, %s196
      %p198 = scmp.eq.s32.totalorder %s24, 0
      %p199 = por %p197, %p198
      %s200 = ssub.s32 %s25, %s37
      %s201 = ssub.s32 %s26, %s33
      %s202 = sor.u32 %s200, %s201
      %p203 = scmp.eq.s32.totalorder %s202, 0
      %s205 = sadd.s32 %s204, 1
      %s206 = scalar_select %p203, %s204, %s205
      %p209 = pneg %p203
      %p210 = scmp.eq.s32.totalorder %s18, 1
      %p211 = por %p209, %p210
      %p212 = scmp.ne.s32.totalorder %s204, %s207
      %p213 = scmp.eq.s32.totalorder %s18, 0
      %p214 = por %p212, %p213
      %p215 = scmp.ne.s32.totalorder %s204, %s207
      %p216 = scmp.eq.s32.totalorder %s23, 1
      %p217 = por %p215, %p216
      %p218 = scmp.ne.s32.totalorder %s207, %s208
      %p219 = scmp.eq.s32.totalorder %s23, 0
      %p220 = por %p218, %p219
      %p221 = scmp.ne.s32.totalorder %s207, %s208
      %p222 = scmp.eq.s32.totalorder %s24, 1
      %p223 = por %p221, %p222
      %p225 = scmp.ne.s32.totalorder %s208, %s224
      %p226 = scmp.eq.s32.totalorder %s24, 0
      %p227 = por %p225, %p226
      %p228 = scmp.le.s32.totalorder 1, %s18
      %p229 = scmp.lt.s32.totalorder %s18, 3
      %p230 = pnand %p228, %p229
      %p231 = pneg %p230
      // Predicated region
      $region9: #{tpu_custom_call.1} parent=5 // pred_check
        _
      $region10: #{tpu_custom_call.1} parent=5 // pred_check_branch
        %233 = sbr.rel (%p230) target = $region12
      $region11: #{tpu_custom_call.1} parent=5 // pred_region
        %s234 = ssub.s32 %s18, 1
        // Predicated region
        $region13: #{tpu_custom_call.1} parent=11 // pred_check
          %p235 = pneg %p56
        $region14: #{tpu_custom_call.1} parent=11 // pred_check_branch
          %237 = sbr.rel (%p235) target = $region16
        $region15: #{tpu_custom_call.1} parent=11 // pred_region
          %s238 = smul.u32 2, %s27
          %s240 = ssub.s32 128, 128
          %241 = vsyncadd [#allocation4], %s240
          %s242 = smul.addr %s238, 64
          %s243 = scalar_lea.hbm %s0, %s242
          %s244 = sshll.u32 [#allocation3], 4
          %s245 = int_to_ptr.vmem [resolvable:$true] %s244
          %250 = dma.hbm_to_vmem [thread:$0]  %s243, 128, %s245, [#allocation4], 64, 64, 4
        $region16: #{tpu_custom_call.1} parent=11 // pred_fallthru
          _
        // Predicated region
        $region17: #{tpu_custom_call.1} parent=11 // pred_check
          %p251 = pneg %p77
        $region18: #{tpu_custom_call.1} parent=11 // pred_check_branch
          %253 = sbr.rel (%p251) target = $region20
        $region19: #{tpu_custom_call.1} parent=11 // pred_region
          %s255 = ssub.s32 1024, 1024
          %256 = vsyncadd [#allocation7], %s255
          %s257 = sshll.u32 [#allocation6], 4
          %s258 = int_to_ptr.vmem [resolvable:$true] %s257
          %263 = dma.hbm_to_vmem [thread:$0]  %s1, 1024, %s258, [#allocation7], 64, 64, 4
        $region20: #{tpu_custom_call.1} parent=11 // pred_fallthru
          _
        // Predicated region
        $region21: #{tpu_custom_call.1} parent=11 // pred_check
          %p264 = pneg %p98
        $region22: #{tpu_custom_call.1} parent=11 // pred_check_branch
          %266 = sbr.rel (%p264) target = $region24
        $region23: #{tpu_custom_call.1} parent=11 // pred_region
          _
        $region24: #{tpu_custom_call.1} parent=11 // pred_fallthru
          _
        // Predicated region
        $region25: #{tpu_custom_call.1} parent=11 // pred_check
          %p267 = pneg %p119
        $region26: #{tpu_custom_call.1} parent=11 // pred_check_branch
          %269 = sbr.rel (%p267) target = $region28
        $region27: #{tpu_custom_call.1} parent=11 // pred_region
          _
        $region28: #{tpu_custom_call.1} parent=11 // pred_fallthru
          _
        // Predicated region
        $region29: #{tpu_custom_call.1} parent=11 // pred_check
          %p270 = pneg %p140
        $region30: #{tpu_custom_call.1} parent=11 // pred_check_branch
          %272 = sbr.rel (%p270) target = $region32
        $region31: #{tpu_custom_call.1} parent=11 // pred_region
          _
        $region32: #{tpu_custom_call.1} parent=11 // pred_fallthru
          _
      $region12: #{tpu_custom_call.1} parent=5 // pred_fallthru
        _
      %p273 = scmp.lt.s32.totalorder %s18, 2
      // Predicated region
      $region33: #{tpu_custom_call.1} parent=5 // pred_check
        %p274 = pneg %p273
      $region34: #{tpu_custom_call.1} parent=5 // pred_check_branch
        %276 = sbr.rel (%p274) target = $region36
      $region35: #{tpu_custom_call.1} parent=5 // pred_region
        // Predicated region
        $region37: #{tpu_custom_call.1} parent=35 // pred_check
          %p277 = pneg %p160
        $region38: #{tpu_custom_call.1} parent=35 // pred_check_branch
          %279 = sbr.rel (%p277) target = $region40
        $region39: #{tpu_custom_call.1} parent=35 // pred_region
          %s280 = sand.u32 %s18, 1
          %s281 = scalar_lea.sflag [#allocation4], %s280
          %s282 = sand.u32 %s150, 1
          %s283 = smul.addr %s282, 256
          %s284 = scalar_lea.vmem [#allocation8], %s283
          %s285 = smul.u32 4, %s26
          %s287 = ssub.s32 4096, 4096
          %288 = vsyncadd %s281, %s287
          %s289 = smul.addr %s285, 64
          %s290 = scalar_lea.hbm %s5, %s289
          %s291 = sshll.u32 %s284, 4
          %s292 = int_to_ptr.vmem [resolvable:$true] %s291
          %297 = dma.hbm_to_vmem [thread:$0]  %s290, 4096, %s292, %s281, 512, 256, 16
        $region40: #{tpu_custom_call.1} parent=35 // pred_fallthru
          _
        // Predicated region
        $region41: #{tpu_custom_call.1} parent=35 // pred_check
          %p298 = pneg %p186
        $region42: #{tpu_custom_call.1} parent=35 // pred_check_branch
          %300 = sbr.rel (%p298) target = $region44
        $region43: #{tpu_custom_call.1} parent=35 // pred_region
          %s301 = smul.u32 4, %s26
          %p302 = scmp.lt.s32.totalorder %s301, 7
          %s303 = scalar_select %p302, %s301, 7
          %s304 = scalar_lea.vmem %s6, %s303
          %s305 = smul.u32 4, %s26
        $region44: #{tpu_custom_call.1} parent=35 // pred_fallthru
          _
      $region36: #{tpu_custom_call.1} parent=5 // pred_fallthru
        _
      %p306 = scmp.le.s32.totalorder 1, %s18
      %p307 = scmp.lt.s32.totalorder %s18, 3
      %p308 = pnand %p306, %p307
      %p309 = pneg %p308
      // Predicated region
      $region45: #{tpu_custom_call.1} parent=5 // pred_check
        _
      $region46: #{tpu_custom_call.1} parent=5 // pred_check_branch
        %311 = sbr.rel (%p308) target = $region48
      $region47: #{tpu_custom_call.1} parent=5 // pred_region
        %s312 = ssub.s32 %s18, 1
        // Predicated region
        $region49: #{tpu_custom_call.1} parent=47 // pred_check
          %p313 = pneg %p56
        $region50: #{tpu_custom_call.1} parent=47 // pred_check_branch
          %315 = sbr.rel (%p313) target = $region52
        $region51: #{tpu_custom_call.1} parent=47 // pred_region
          %316 = dma.done [#allocation4], 128
        $region52: #{tpu_custom_call.1} parent=47 // pred_fallthru
          _
        // Predicated region
        $region53: #{tpu_custom_call.1} parent=47 // pred_check
          %p317 = pneg %p77
        $region54: #{tpu_custom_call.1} parent=47 // pred_check_branch
          %319 = sbr.rel (%p317) target = $region56
        $region55: #{tpu_custom_call.1} parent=47 // pred_region
          %320 = dma.done [#allocation7], 1024
        $region56: #{tpu_custom_call.1} parent=47 // pred_fallthru
          _
        %s321 = sand.u32 %s23, 1
        %s322 = scalar_lea.sflag [#allocation4], %s321
        %s323 = sand.u32 %s153, 1
        %s324 = smul.addr %s323, 256
        %s325 = scalar_lea.vmem [#allocation8], %s324
        // Predicated region
        $region57: #{tpu_custom_call.1} parent=47 // pred_check
          %p326 = pneg %p166
        $region58: #{tpu_custom_call.1} parent=47 // pred_check_branch
          %328 = sbr.rel (%p326) target = $region60
        $region59: #{tpu_custom_call.1} parent=47 // pred_region
          %329 = dma.done %s322, 4096
        $region60: #{tpu_custom_call.1} parent=47 // pred_fallthru
          _
        %p330 = pneg %p56
        %p331 = pneg %p53
        %p332 = pneg %p77
        %p333 = pneg %p74
        %p334 = pneg %p98
        %p335 = pneg %p95
        %p336 = pneg %p119
        %p337 = pneg %p116
        %p338 = pneg %p140
        %p339 = pneg %p137
        %s340 = sand.u32 %s23, 1
        %s341 = scalar_lea.sflag [#allocation4], %s340
        %s342 = sand.u32 %s153, 1
        %s343 = smul.addr %s342, 256
        %s344 = scalar_lea.vmem [#allocation8], %s343
        %p345 = pneg %p166
        %p346 = pneg %p163
        %s347 = smul.u32 4, %s28
        %p348 = scmp.lt.s32.totalorder %s347, 7
        %s349 = scalar_select %p348, %s347, 7
        %s350 = scalar_lea.vmem %s6, %s349
        %p351 = pneg %p192
        %p352 = pneg %p189
        %p353 = pneg %p220
        %p354 = pneg %p217
        %s355 = sand.u32 %s207, 1
        %s356 = scalar_lea.sflag [#allocation5], %s355
        %s357 = sand.u32 %s207, 1
        %s358 = smul.addr %s357, 64
        %s359 = scalar_lea.vmem [#allocation9], %s358
        %s360 = smul.u32 2, %s27
        %s361 = smul.u32 4, %s28
        %s362 = smul.u32 4, %s28
        %p363 = scmp.lt.s32.totalorder %s362, 7
        %s364 = scalar_select %p363, %s362, 7
        %s365 = scalar_lea.vmem %s6, %s364
        %s366 = smul.u32 4, %s28
        %s367 = smul.u32 2, %s27
        %s368 = smul.u32 4, %s28
        %p370 = scmp.eq.s32.totalorder %s28, 0
        // Predicated region
        $region61: #{tpu_custom_call.1} parent=47 // pred_check
          %p371 = pneg %p370
        $region62: #{tpu_custom_call.1} parent=47 // pred_check_branch
          %373 = sbr.rel (%p371) target = $region64
        $region63: #{tpu_custom_call.1} parent=47 // pred_region
          %v374 = vld [vmem:[#allocation3] sm:$0xf]
          %v375 = vld [vmem:[#allocation3 + $0x4] sm:$0xf]
          %v376 = vld [vmem:[#allocation6] sm:$0xf]
          %v377 = vld [vmem:[#allocation6 + $0x4] sm:$0xf]
          %v378 = vld [vmem:[#allocation6 + $0x8] sm:$0xf]
          %v379 = vld [vmem:[#allocation6 + $0xc] sm:$0xf]
          %v380 = vld [vmem:[#allocation6 + $0x10] sm:$0xf]
          %v381 = vld [vmem:[#allocation6 + $0x14] sm:$0xf]
          %v382 = vld [vmem:[#allocation6 + $0x18] sm:$0xf]
          %v383 = vld [vmem:[#allocation6 + $0x1c] sm:$0xf]
          %v384 = vld [vmem:[#allocation6 + $0x20] sm:$0xf]
          %v385 = vld [vmem:[#allocation6 + $0x24] sm:$0xf]
          %v386 = vld [vmem:[#allocation6 + $0x28] sm:$0xf]
          %v387 = vld [vmem:[#allocation6 + $0x2c] sm:$0xf]
          %v388 = vld [vmem:[#allocation6 + $0x30] sm:$0xf]
          %v389 = vld [vmem:[#allocation6 + $0x34] sm:$0xf]
          %v390 = vld [vmem:[#allocation6 + $0x38] sm:$0xf]
          %v391 = vld [vmem:[#allocation6 + $0x3c] sm:$0xf]
          %v392 = vld [vmem:[%s2] sm:$0x1]
          %v394 = vlaneseq
          %v395 = vshrl.u32 %v394, 7
          %v396 = vsub.s32 0, %v395
          %v397 = vrot.slane %v392, %v396
          %v401 = vunpack.c.l.b16 %v374
          %v402 = vunpack.c.l.b16 %v375
          %v403 = vpack.c.b16 %v402, %v401
          %v421 = vunpack.c.l.b16 %v376
          %v422 = vunpack.c.l.b16 %v377
          %v423 = vunpack.c.l.b16 %v378
          %v424 = vunpack.c.l.b16 %v379
          %v425 = vunpack.c.l.b16 %v380
          %v426 = vunpack.c.l.b16 %v381
          %v427 = vunpack.c.l.b16 %v382
          %v428 = vunpack.c.l.b16 %v383
          %v429 = vunpack.c.l.b16 %v384
          %v430 = vunpack.c.l.b16 %v385
          %v431 = vunpack.c.l.b16 %v386
          %v432 = vunpack.c.l.b16 %v387
          %v433 = vunpack.c.l.b16 %v388
          %v434 = vunpack.c.l.b16 %v389
          %v435 = vunpack.c.l.b16 %v390
          %v436 = vunpack.c.l.b16 %v391
          %v437 = vpack.c.b16 %v422, %v421
          %v438 = vpack.c.b16 %v424, %v423
          %v439 = vpack.c.b16 %v426, %v425
          %v440 = vpack.c.b16 %v428, %v427
          %v441 = vpack.c.b16 %v430, %v429
          %v442 = vpack.c.b16 %v432, %v431
          %v443 = vpack.c.b16 %v434, %v433
          %v444 = vpack.c.b16 %v436, %v435
          %453 = vmatprep.subr.bf16.mxu0 0
          %454 = vmatpush1.bf16.msra.mxu0 %v437
          %455 = vmatprep.subr.bf16.mxu0 0
          %456 = vmatpush1.bf16.msra.mxu0 %v438
          %457 = vmatprep.subr.bf16.mxu0 0
          %458 = vmatpush1.bf16.msra.mxu0 %v439
          %459 = vmatprep.subr.bf16.mxu0 0
          %460 = vmatpush1.bf16.msra.mxu0 %v440
          %461 = vmatprep.subr.bf16.mxu0 0
          %462 = vmatpush1.bf16.msra.mxu0 %v441
          %463 = vmatprep.subr.bf16.mxu0 0
          %464 = vmatpush1.bf16.msra.mxu0 %v442
          %465 = vmatprep.subr.bf16.mxu0 0
          %466 = vmatpush1.bf16.msra.mxu0 %v443
          %467 = vmatprep.subr.bf16.mxu0 0
          %468 = vmatpush1.bf16.msra.mxu0 %v444
          %469 = vmatprep.subr.bf16.mxu0 0
          %470 = vmatpush1.bf16.msra.mxu0 0
          %471 = vmatprep.subr.bf16.mxu0 0
          %472 = vmatpush1.bf16.msra.mxu0 0
          %473 = vmatprep.subr.bf16.mxu0 0
          %474 = vmatpush1.bf16.msra.mxu0 0
          %475 = vmatprep.subr.bf16.mxu0 0
          %476 = vmatpush1.bf16.msra.mxu0 0
          %477 = vmatprep.subr.bf16.mxu0 0
          %478 = vmatpush1.bf16.msra.mxu0 0
          %479 = vmatprep.subr.bf16.mxu0 0
          %480 = vmatpush1.bf16.msra.mxu0 0
          %481 = vmatprep.subr.bf16.mxu0 0
          %482 = vmatpush1.bf16.msra.mxu0 0
          %483 = vmatprep.subr.bf16.mxu0 0
          %484 = vmatpush1.bf16.msra.mxu0 0
          %485 = vmatprep.mubr.bf16.mxu0 0
          %486 = vmatmul.mubr.bf16.gmra.mrb[0].mxu0 %v403
          %v487 = vpop.f32.mrb[0].mxu0
          %v488 = vadd.f32 %v397, %v487
          %v489 = vpop.f32.mrb[0].mxu0
          %v490 = vpop.f32.mrb[0].mxu0
          %v491 = vadd.f32 %v397, %v490
          %v492 = vpop.f32.mrb[0].mxu0
          %493 = vdwg.mxu0
          %v494 = vmul.f32 %v488, %v488
          %v495 = vmul.f32 %v491, %v491
          %v496 = vmul.f32 %v488, %v494
          %v497 = vmul.f32 %v491, %v495
          %v498 = vmul.f32 %v496, 0.044715
          %v499 = vmul.f32 %v497, 0.044715
          %v500 = vadd.f32 %v488, %v498
          %v501 = vadd.f32 %v491, %v499
          %v502 = vmul.f32 %v500, 0.7978846
          %v503 = vmul.f32 %v501, 0.7978846
          %v504 = vtanh.pop %v502
          %v505 = vtanh.pop %v503
          %v506 = vadd.f32 %v504, 1.0
          %v507 = vadd.f32 %v505, 1.0
          %v508 = vmul.f32 %v506, 0.5
          %v509 = vmul.f32 %v507, 0.5
          %v510 = vmul.f32 %v488, %v508
          %v511 = vmul.f32 %v491, %v509
          %512 = vadd.xlane.f32.xlu0 %v510
          %v513 = vpop.xlane.xlu0 %512
          %514 = vadd.xlane.f32.xlu0 %v511
          %v515 = vpop.xlane.xlu0 %514
          %v516 = vrcp.pop 128.0
          %v517 = vmul.f32 %v513, %v516
          %v518 = vmul.f32 %v515, %v516
          %v519 = vsub.f32 %v510, %v517
          %v520 = vsub.f32 %v511, %v518
          %v521 = vmul.f32 %v519, %v519
          %v522 = vmul.f32 %v520, %v520
          %523 = vadd.xlane.f32.xlu0 %v521
          %v524 = vpop.xlane.xlu0 %523
          %525 = vadd.xlane.f32.xlu0 %v522
          %v526 = vpop.xlane.xlu0 %525
          %v527 = vmul.f32 %v524, %v516
          %v528 = vmul.f32 %v526, %v516
          %v529 = vadd.f32 %v527, 1e-12
          %v530 = vadd.f32 %v528, 1e-12
          %v531 = vrsqrt.pop %v529
          %v532 = vrsqrt.pop %v530
          %v533 = vmul.f32 %v519, %v531
          %v534 = vmul.f32 %v520, %v532
          %v535 = vld [vmem:[%s3] sm:$0x1]
          %v537 = vlaneseq
          %v538 = vshrl.u32 %v537, 7
          %v539 = vsub.s32 0, %v538
          %v540 = vrot.slane %v535, %v539
          %v542 = vmul.f32 %v533, %v540
          %v543 = vmul.f32 %v534, %v540
          %v544 = vld [vmem:[%s4] sm:$0x1]
          %v546 = vlaneseq
          %v547 = vshrl.u32 %v546, 7
          %v548 = vsub.s32 0, %v547
          %v549 = vrot.slane %v544, %v548
          %v551 = vadd.f32 %v542, %v549
          %v552 = vadd.f32 %v543, %v549
          %v553 = vpack.c.bf16 %v552, %v551
          %554 = vst [vmem:[#allocation2] sm:$0xff] %v553
        $region64: #{tpu_custom_call.1} parent=47 // pred_fallthru
          _
        %v555 = vld [vmem:[#allocation2] sm:$0xff]
        %v556 = vld [vmem:[%s325] sm:$0xff]
        %v557 = vld [vmem:[%s325 + $0x8] sm:$0xff]
        %v558 = vld [vmem:[%s325 + $0x10] sm:$0xff]
        %v559 = vld [vmem:[%s325 + $0x18] sm:$0xff]
        %v560 = vld [vmem:[%s325 + $0x20] sm:$0xff]
        %v561 = vld [vmem:[%s325 + $0x28] sm:$0xff]
        %v562 = vld [vmem:[%s325 + $0x30] sm:$0xff]
        %v563 = vld [vmem:[%s325 + $0x38] sm:$0xff]
        %v564 = vld [vmem:[%s325 + $0x40] sm:$0xff]
        %v565 = vld [vmem:[%s325 + $0x48] sm:$0xff]
        %v566 = vld [vmem:[%s325 + $0x50] sm:$0xff]
        %v567 = vld [vmem:[%s325 + $0x58] sm:$0xff]
        %v568 = vld [vmem:[%s325 + $0x60] sm:$0xff]
        %v569 = vld [vmem:[%s325 + $0x68] sm:$0xff]
        %v570 = vld [vmem:[%s325 + $0x70] sm:$0xff]
        %v571 = vld [vmem:[%s325 + $0x78] sm:$0xff]
        %v572 = vld [vmem:[%s325 + $0x80] sm:$0xff]
        %v573 = vld [vmem:[%s325 + $0x88] sm:$0xff]
        %v574 = vld [vmem:[%s325 + $0x90] sm:$0xff]
        %v575 = vld [vmem:[%s325 + $0x98] sm:$0xff]
        %v576 = vld [vmem:[%s325 + $0xa0] sm:$0xff]
        %v577 = vld [vmem:[%s325 + $0xa8] sm:$0xff]
        %v578 = vld [vmem:[%s325 + $0xb0] sm:$0xff]
        %v579 = vld [vmem:[%s325 + $0xb8] sm:$0xff]
        %v580 = vld [vmem:[%s325 + $0xc0] sm:$0xff]
        %v581 = vld [vmem:[%s325 + $0xc8] sm:$0xff]
        %v582 = vld [vmem:[%s325 + $0xd0] sm:$0xff]
        %v583 = vld [vmem:[%s325 + $0xd8] sm:$0xff]
        %v584 = vld [vmem:[%s325 + $0xe0] sm:$0xff]
        %v585 = vld [vmem:[%s325 + $0xe8] sm:$0xff]
        %v586 = vld [vmem:[%s325 + $0xf0] sm:$0xff]
        %v587 = vld [vmem:[%s325 + $0xf8] sm:$0xff]
        %v588 = vld [vmem:[%s365] sm:$0xf]
        %v590 = vlaneseq
        %v591 = vshrl.u32 %v590, 7
        %v592 = vsub.s32 0, %v591
        %v593 = vrot.slane %v588, %v592
        %v594 = vlaneseq
        %v595 = vshrl.u32 %v594, 7
        %v596 = vsub.s32 1, %v595
        %v597 = vrot.slane %v588, %v596
        %v598 = vlaneseq
        %v599 = vshrl.u32 %v598, 7
        %v600 = vsub.s32 2, %v599
        %v601 = vrot.slane %v588, %v600
        %v602 = vlaneseq
        %v603 = vshrl.u32 %v602, 7
        %v604 = vsub.s32 3, %v603
        %v605 = vrot.slane %v588, %v604
        %v642 = vunpack.c.l.b16 %v556
        %v643 = vunpack.c.h.b16 %v556
        %v644 = vunpack.c.l.b16 %v557
        %v645 = vunpack.c.h.b16 %v557
        %v646 = vunpack.c.l.b16 %v558
        %v647 = vunpack.c.h.b16 %v558
        %v648 = vunpack.c.l.b16 %v559
        %v649 = vunpack.c.h.b16 %v559
        %v650 = vunpack.c.l.b16 %v560
        %v651 = vunpack.c.h.b16 %v560
        %v652 = vunpack.c.l.b16 %v561
        %v653 = vunpack.c.h.b16 %v561
        %v654 = vunpack.c.l.b16 %v562
        %v655 = vunpack.c.h.b16 %v562
        %v656 = vunpack.c.l.b16 %v563
        %v657 = vunpack.c.h.b16 %v563
        %v658 = vunpack.c.l.b16 %v564
        %v659 = vunpack.c.h.b16 %v564
        %v660 = vunpack.c.l.b16 %v565
        %v661 = vunpack.c.h.b16 %v565
        %v662 = vunpack.c.l.b16 %v566
        %v663 = vunpack.c.h.b16 %v566
        %v664 = vunpack.c.l.b16 %v567
        %v665 = vunpack.c.h.b16 %v567
        %v666 = vunpack.c.l.b16 %v568
        %v667 = vunpack.c.h.b16 %v568
        %v668 = vunpack.c.l.b16 %v569
        %v669 = vunpack.c.h.b16 %v569
        %v670 = vunpack.c.l.b16 %v570
        %v671 = vunpack.c.h.b16 %v570
        %v672 = vunpack.c.l.b16 %v571
        %v673 = vunpack.c.h.b16 %v571
        %v674 = vunpack.c.l.b16 %v572
        %v675 = vunpack.c.h.b16 %v572
        %v676 = vunpack.c.l.b16 %v573
        %v677 = vunpack.c.h.b16 %v573
        %v678 = vunpack.c.l.b16 %v574
        %v679 = vunpack.c.h.b16 %v574
        %v680 = vunpack.c.l.b16 %v575
        %v681 = vunpack.c.h.b16 %v575
        %v682 = vunpack.c.l.b16 %v576
        %v683 = vunpack.c.h.b16 %v576
        %v684 = vunpack.c.l.b16 %v577
        %v685 = vunpack.c.h.b16 %v577
        %v686 = vunpack.c.l.b16 %v578
        %v687 = vunpack.c.h.b16 %v578
        %v688 = vunpack.c.l.b16 %v579
        %v689 = vunpack.c.h.b16 %v579
        %v690 = vunpack.c.l.b16 %v580
        %v691 = vunpack.c.h.b16 %v580
        %v692 = vunpack.c.l.b16 %v581
        %v693 = vunpack.c.h.b16 %v581
        %v694 = vunpack.c.l.b16 %v582
        %v695 = vunpack.c.h.b16 %v582
        %v696 = vunpack.c.l.b16 %v583
        %v697 = vunpack.c.h.b16 %v583
        %v698 = vunpack.c.l.b16 %v584
        %v699 = vunpack.c.h.b16 %v584
        %v700 = vunpack.c.l.b16 %v585
        %v701 = vunpack.c.h.b16 %v585
        %v702 = vunpack.c.l.b16 %v586
        %v703 = vunpack.c.h.b16 %v586
        %v704 = vunpack.c.l.b16 %v587
        %v705 = vunpack.c.h.b16 %v587
        %v706 = vpack.c.b16 %v646, %v642
        %v707 = vpack.c.b16 %v647, %v643
        %v708 = vpack.c.b16 %v648, %v644
        %v709 = vpack.c.b16 %v649, %v645
        %v710 = vpack.c.b16 %v654, %v650
        %v711 = vpack.c.b16 %v655, %v651
        %v712 = vpack.c.b16 %v656, %v652
        %v713 = vpack.c.b16 %v657, %v653
        %v714 = vpack.c.b16 %v662, %v658
        %v715 = vpack.c.b16 %v663, %v659
        %v716 = vpack.c.b16 %v664, %v660
        %v717 = vpack.c.b16 %v665, %v661
        %v718 = vpack.c.b16 %v670, %v666
        %v719 = vpack.c.b16 %v671, %v667
        %v720 = vpack.c.b16 %v672, %v668
        %v721 = vpack.c.b16 %v673, %v669
        %v722 = vpack.c.b16 %v678, %v674
        %v723 = vpack.c.b16 %v679, %v675
        %v724 = vpack.c.b16 %v680, %v676
        %v725 = vpack.c.b16 %v681, %v677
        %v726 = vpack.c.b16 %v686, %v682
        %v727 = vpack.c.b16 %v687, %v683
        %v728 = vpack.c.b16 %v688, %v684
        %v729 = vpack.c.b16 %v689, %v685
        %v730 = vpack.c.b16 %v694, %v690
        %v731 = vpack.c.b16 %v695, %v691
        %v732 = vpack.c.b16 %v696, %v692
        %v733 = vpack.c.b16 %v697, %v693
        %v734 = vpack.c.b16 %v702, %v698
        %v735 = vpack.c.b16 %v703, %v699
        %v736 = vpack.c.b16 %v704, %v700
        %v737 = vpack.c.b16 %v705, %v701
        %770 = vmatprep.subr.bf16.mxu0 %v707
        %771 = vmatpush1.bf16.msra.mxu0 %v706
        %772 = vmatprep.subr.bf16.mxu0 %v711
        %773 = vmatpush1.bf16.msra.mxu0 %v710
        %774 = vmatprep.subr.bf16.mxu0 %v715
        %775 = vmatpush1.bf16.msra.mxu0 %v714
        %776 = vmatprep.subr.bf16.mxu0 %v719
        %777 = vmatpush1.bf16.msra.mxu0 %v718
        %778 = vmatprep.subr.bf16.mxu0 %v723
        %779 = vmatpush1.bf16.msra.mxu0 %v722
        %780 = vmatprep.subr.bf16.mxu0 %v727
        %781 = vmatpush1.bf16.msra.mxu0 %v726
        %782 = vmatprep.subr.bf16.mxu0 %v731
        %783 = vmatpush1.bf16.msra.mxu0 %v730
        %784 = vmatprep.subr.bf16.mxu0 %v735
        %785 = vmatpush1.bf16.msra.mxu0 %v734
        %786 = vmatprep.subr.bf16.mxu0 0
        %787 = vmatpush1.bf16.msra.mxu0 0
        %788 = vmatprep.subr.bf16.mxu0 0
        %789 = vmatpush1.bf16.msra.mxu0 0
        %790 = vmatprep.subr.bf16.mxu0 0
        %791 = vmatpush1.bf16.msra.mxu0 0
        %792 = vmatprep.subr.bf16.mxu0 0
        %793 = vmatpush1.bf16.msra.mxu0 0
        %794 = vmatprep.subr.bf16.mxu0 0
        %795 = vmatpush1.bf16.msra.mxu0 0
        %796 = vmatprep.subr.bf16.mxu0 0
        %797 = vmatpush1.bf16.msra.mxu0 0
        %798 = vmatprep.subr.bf16.mxu0 0
        %799 = vmatpush1.bf16.msra.mxu0 0
        %800 = vmatprep.subr.bf16.mxu0 0
        %801 = vmatpush1.bf16.msra.mxu0 0
        %802 = vmatprep.mubr.bf16.mxu0 0
        %803 = vmatmul.mubr.bf16.gmra.mrb[0].mxu0 %v555
        %v804 = vpop.f32.mrb[0].mxu0
        %v805 = vadd.f32 %v593, %v804
        %v806 = vpop.f32.mrb[0].mxu0
        %v807 = vadd.f32 %v597, %v806
        %v808 = vpop.f32.mrb[0].mxu0
        %v809 = vadd.f32 %v593, %v808
        %v810 = vpop.f32.mrb[0].mxu0
        %v811 = vadd.f32 %v597, %v810
        %812 = vdwg.mxu0
        %813 = vmatprep.subr.bf16.mxu0 %v709
        %814 = vmatpush1.bf16.msra.mxu0 %v708
        %815 = vmatprep.subr.bf16.mxu0 %v713
        %816 = vmatpush1.bf16.msra.mxu0 %v712
        %817 = vmatprep.subr.bf16.mxu0 %v717
        %818 = vmatpush1.bf16.msra.mxu0 %v716
        %819 = vmatprep.subr.bf16.mxu0 %v721
        %820 = vmatpush1.bf16.msra.mxu0 %v720
        %821 = vmatprep.subr.bf16.mxu0 %v725
        %822 = vmatpush1.bf16.msra.mxu0 %v724
        %823 = vmatprep.subr.bf16.mxu0 %v729
        %824 = vmatpush1.bf16.msra.mxu0 %v728
        %825 = vmatprep.subr.bf16.mxu0 %v733
        %826 = vmatpush1.bf16.msra.mxu0 %v732
        %827 = vmatprep.subr.bf16.mxu0 %v737
        %828 = vmatpush1.bf16.msra.mxu0 %v736
        %829 = vmatprep.subr.bf16.mxu0 0
        %830 = vmatpush1.bf16.msra.mxu0 0
        %831 = vmatprep.subr.bf16.mxu0 0
        %832 = vmatpush1.bf16.msra.mxu0 0
        %833 = vmatprep.subr.bf16.mxu0 0
        %834 = vmatpush1.bf16.msra.mxu0 0
        %835 = vmatprep.subr.bf16.mxu0 0
        %836 = vmatpush1.bf16.msra.mxu0 0
        %837 = vmatprep.subr.bf16.mxu0 0
        %838 = vmatpush1.bf16.msra.mxu0 0
        %839 = vmatprep.subr.bf16.mxu0 0
        %840 = vmatpush1.bf16.msra.mxu0 0
        %841 = vmatprep.subr.bf16.mxu0 0
        %842 = vmatpush1.bf16.msra.mxu0 0
        %843 = vmatprep.subr.bf16.mxu0 0
        %844 = vmatpush1.bf16.msra.mxu0 0
        %845 = vmatprep.mubr.bf16.mxu0 0
        %846 = vmatmul.mubr.bf16.gmra.mrb[0].mxu0 %v555
        %v847 = vpop.f32.mrb[0].mxu0
        %v848 = vadd.f32 %v601, %v847
        %v849 = vpop.f32.mrb[0].mxu0
        %v850 = vadd.f32 %v605, %v849
        %v851 = vpop.f32.mrb[0].mxu0
        %v852 = vadd.f32 %v601, %v851
        %v853 = vpop.f32.mrb[0].mxu0
        %v854 = vadd.f32 %v605, %v853
        %855 = vdwg.mxu0
        %856 = vst [vmem:[%s359] sm:$0xff] %v805
        %857 = vst [vmem:[%s359 + $0x8] sm:$0xff] %v807
        %858 = vst [vmem:[%s359 + $0x10] sm:$0xff] %v848
        %859 = vst [vmem:[%s359 + $0x18] sm:$0xff] %v850
        %860 = vst [vmem:[%s359 + $0x20] sm:$0xff] %v809
        %861 = vst [vmem:[%s359 + $0x28] sm:$0xff] %v811
        %862 = vst [vmem:[%s359 + $0x30] sm:$0xff] %v852
        %863 = vst [vmem:[%s359 + $0x38] sm:$0xff] %v854
        %s864 = sand.u32 %s207, 1
        %s865 = scalar_lea.sflag [#allocation5], %s864
        %s866 = sand.u32 %s207, 1
        %s867 = smul.addr %s866, 64
        %s868 = scalar_lea.vmem [#allocation9], %s867
        // Predicated region
        $region65: #{tpu_custom_call.1} parent=47 // pred_check
          %p869 = pneg %p217
        $region66: #{tpu_custom_call.1} parent=47 // pred_check_branch
          %871 = sbr.rel (%p869) target = $region68
        $region67: #{tpu_custom_call.1} parent=47 // pred_region
          %s872 = smul.u32 2, %s27
          %s873 = smul.u32 4, %s28
          %s875 = ssub.s32 1024, 1024
          %876 = vsyncadd %s865, %s875
          %s877 = smul.addr %s872, 8
          %s878 = sadd.s32 %s873, %s877
          %s879 = smul.addr %s878, 128
          %s880 = scalar_lea.hbm %s7, %s879
          %s881 = sshll.u32 %s868, 4
          %s882 = int_to_ptr.vmem [resolvable:$true] %s881
          %887 = dma.vmem_to_hbm [thread:$0]  %s882, 1024, %s880, %s865, 512, 1024, 32
        $region68: #{tpu_custom_call.1} parent=47 // pred_fallthru
          _
      $region48: #{tpu_custom_call.1} parent=5 // pred_fallthru
        _
      %p888 = scmp.le.s32.totalorder 2, %s18
      // Predicated region
      $region69: #{tpu_custom_call.1} parent=5 // pred_check
        %p889 = pneg %p888
      $region70: #{tpu_custom_call.1} parent=5 // pred_check_branch
        %891 = sbr.rel (%p889) target = $region72
      $region71: #{tpu_custom_call.1} parent=5 // pred_region
        %s892 = ssub.s32 %s18, 2
        // Predicated region
        $region73: #{tpu_custom_call.1} parent=71 // pred_check
          %p893 = pneg %p223
        $region74: #{tpu_custom_call.1} parent=71 // pred_check_branch
          %895 = sbr.rel (%p893) target = $region76
        $region75: #{tpu_custom_call.1} parent=71 // pred_region
          %s896 = sand.u32 %s208, 1
          %s897 = scalar_lea.sflag [#allocation5], %s896
          %s898 = sand.u32 %s208, 1
          %s899 = smul.addr %s898, 64
          %s900 = scalar_lea.vmem [#allocation9], %s899
          %901 = dma.done %s897, 1024
        $region76: #{tpu_custom_call.1} parent=71 // pred_fallthru
          _
      $region72: #{tpu_custom_call.1} parent=5 // pred_fallthru
        _
    $region6: #{tpu_custom_call.1} parent=1 // loop_footer
      %s22 = sadd.s32 1, %s18
    $region7: #{tpu_custom_call.1} parent=1 // loop_footer_branch
      %17 = sbr.rel target = $region3
    $region8: #{tpu_custom_call.1} parent=1 // loop_exit
      _
    %902 = vsyncpa [#allocation4], 1
    %s903 = scalar_lea.sflag [#allocation4], 1
    %904 = vsyncpa %s903, 1
    %905 = vsyncpa [#allocation7], 1
    %906 = vsyncpa [#allocation5], 1
    %s907 = scalar_lea.sflag [#allocation5], 1
    %908 = vsyncpa %s907, 1

</llo_original>
